<compile_context>
chip_gen: v5e
topology: v5e:2x2
jax: 0.10.0
libtpu: 0.0.40
codegen_flags: <defaults>
</compile_context>

<pallas_src>
import functools

import jax
import jax.numpy as jnp
from jax.experimental import pallas as pl
from jax.experimental.pallas import tpu as pltpu


def mlp_kernel(x_ref, w1_ref, b1_ref, w2_ref, b2_ref, o_ref):
    # Cast x to bf16 only at the MXU input (no wrapper-side pre-cast HLO).
    x = x_ref[...].astype(jnp.bfloat16)
    # Layer 1: bf16 x bf16 -> f32 accumulation on the MXU; bias + ReLU in f32 on the VPU.
    h = jnp.dot(x, w1_ref[...], preferred_element_type=jnp.float32)
    h = jnp.maximum(h + b1_ref[...], 0.0)            # b1 is (1, H), broadcasts over batch
    # Layer 2: cast activations to bf16 only at the MXU input; accumulate in f32.
    out = jnp.dot(h.astype(jnp.bfloat16), w2_ref[...],
                  preferred_element_type=jnp.float32)
    o_ref[...] = (out + b2_ref[...]).astype(o_ref.dtype)   # b2 is (1, C_pad)


def prepare_params(w1, b1, w2, b2):
    """One-time parameter prep (do NOT call per forward).

    w1: (D_in, H), b1: (H,), w2: (H, C), b2: (C,)  ->  padded / bf16 kernel params.
    """
    D_in, H = w1.shape
    C = w2.shape[1]
    C_pad = pl.cdiv(C, 128) * 128          # lane-dense output: unmasked stores

    w1_b = w1.astype(jnp.bfloat16)
    b1_r = b1.reshape(1, H).astype(jnp.float32)
    w2_p = jnp.zeros((H, C_pad), jnp.bfloat16).at[:, :C].set(w2.astype(jnp.bfloat16))
    b2_p = jnp.zeros((1, C_pad), jnp.float32).at[:, :C].set(
        b2.reshape(1, C).astype(jnp.float32))
    return dict(w1=w1_b, b1=b1_r, w2=w2_p, b2=b2_p, num_classes=C)


def mlp_forward(x, params, *, tm=None):
    """x: (B, D_in) f32; params from prepare_params().  Returns (B, num_classes) f32.

    tm=None -> single grid step (best on single-TC v5e/v6e at small/medium batch).
    On v7x with large B, pass e.g. tm = B // 4 so each TC pipelines >= 2 steps.
    """
    w1_b, b1_r, w2_p, b2_p = params["w1"], params["b1"], params["w2"], params["b2"]
    C = params["num_classes"]
    B, D_in = x.shape
    H = w1_b.shape[1]
    C_pad = w2_p.shape[1]

    if tm is None:
        tm = pl.cdiv(B, 8) * 8             # one grid step, sublane-aligned
    B_pad = pl.cdiv(B, tm) * tm

    # Only pad the batch if it doesn't divide evenly (no-op HLO otherwise).
    x_p = x if B_pad == B else jnp.zeros((B_pad, D_in), x.dtype).at[:B, :].set(x)

    grid = (B_pad // tm,)
    resident = dict(pipeline_mode=pl.Buffered(1))   # constant index_map -> 1 buffer

    out = pl.pallas_call(
        mlp_kernel,
        out_shape=jax.ShapeDtypeStruct((B_pad, C_pad), jnp.float32),
        grid_spec=pltpu.PrefetchScalarGridSpec(
            num_scalar_prefetch=0,
            grid=grid,
            in_specs=[
                pl.BlockSpec((tm, D_in), lambda i: (i, 0)),              # x: tiled on batch
                pl.BlockSpec((D_in, H), lambda i: (0, 0), **resident),   # W1: resident
                pl.BlockSpec((1, H), lambda i: (0, 0), **resident),      # b1: resident
                pl.BlockSpec((H, C_pad), lambda i: (0, 0), **resident),  # W2: resident
                pl.BlockSpec((1, C_pad), lambda i: (0, 0), **resident),  # b2: resident
            ],
            out_specs=pl.BlockSpec((tm, C_pad), lambda i: (i, 0)),
        ),
        compiler_params=pltpu.CompilerParams(
            dimension_semantics=("parallel",),   # v7x: shard batch tiles across both TCs
        ),
    )(x_p, w1_b, b1_r, w2_p, b2_p)

    return out[:B, :C]


if __name__ == "__main__":
    # Small shapes consistent with the FFNN spec (Linear -> ReLU -> Linear).
    B, input_size, hidden_size, num_classes = 8, 32, 32, 10

    key = jax.random.PRNGKey(0)
    kx, k1, k2, k3, k4 = jax.random.split(key, 5)

    x = jax.random.normal(kx, (B, input_size), dtype=jnp.float32)

    # Deterministic parameter init (PyTorch-Linear-style uniform bounds), already laid
    # out (in_features, out_features).  PyTorch nn.Linear weights would need a .T first.
    bound1 = 1.0 / (input_size ** 0.5)
    w1 = jax.random.uniform(k1, (input_size, hidden_size), jnp.float32, -bound1, bound1)
    b1 = jax.random.uniform(k2, (hidden_size,), jnp.float32, -bound1, bound1)
    bound2 = 1.0 / (hidden_size ** 0.5)
    w2 = jax.random.uniform(k3, (hidden_size, num_classes), jnp.float32, -bound2, bound2)
    b2 = jax.random.uniform(k4, (num_classes,), jnp.float32, -bound2, bound2)

    # One-time param prep (bf16 cast + lane padding), reused across forward calls.
    params = jax.tree_util.tree_map(jax.block_until_ready, prepare_params(w1, b1, w2, b2))

    out = jax.block_until_ready(mlp_forward(x, params))
    assert out.shape == (B, num_classes)

    # Tight reference: same bf16-cast MXU inputs, f32 accumulation (matches kernel math).
    xb = x.astype(jnp.bfloat16).astype(jnp.float32)
    w1b = w1.astype(jnp.bfloat16).astype(jnp.float32)
    w2b = w2.astype(jnp.bfloat16).astype(jnp.float32)
    h_ref = jnp.maximum(xb @ w1b + b1, 0.0)
    ref_bf16 = h_ref.astype(jnp.bfloat16).astype(jnp.float32) @ w2b + b2
    assert jnp.allclose(out, ref_bf16, atol=2e-3, rtol=2e-3), "mismatch vs bf16-input reference"

    # Loose sanity check vs the pure-f32 PyTorch-equivalent forward (bf16 truncation slack).
    ref_f32 = jnp.maximum(x @ w1 + b1, 0.0) @ w2 + b2
    assert jnp.allclose(out, ref_f32, atol=1e-1, rtol=1e-1), "mismatch vs f32 reference"

    print("KERNEL_OK")
</pallas_src>

<mosaic_0001>
module attributes {stable_mosaic.version = 11 : i64} {
  func.func @mlp_kernel(%arg0: i32, %arg1: memref<8x32xf32, #tpu.memory_space<vmem>>, %arg2: memref<32x32xbf16, #tpu.memory_space<vmem>>, %arg3: memref<1x32xf32, #tpu.memory_space<vmem>>, %arg4: memref<32x128xbf16, #tpu.memory_space<vmem>>, %arg5: memref<1x128xf32, #tpu.memory_space<vmem>>, %arg6: memref<8x128xf32, #tpu.memory_space<vmem>>) attributes {dimension_semantics = [#tpu.dimension_semantics<parallel>], iteration_bounds = array<i64: 1>, scalar_prefetch = 0 : i64, scratch_operands = 0 : i64, tpu.core_type = #tpu.core_type<tc>, window_params = [{transform_indices = @transform_0, window_bounds = array<i64: 8, 32>}, {pipeline_mode = #tpu.pipeline_mode<synchronous>, transform_indices = @transform_1, window_bounds = array<i64: 32, 32>}, {pipeline_mode = #tpu.pipeline_mode<synchronous>, transform_indices = @transform_2, window_bounds = array<i64: 1, 32>}, {pipeline_mode = #tpu.pipeline_mode<synchronous>, transform_indices = @transform_3, window_bounds = array<i64: 32, 128>}, {pipeline_mode = #tpu.pipeline_mode<synchronous>, transform_indices = @transform_4, window_bounds = array<i64: 1, 128>}, {transform_indices = @transform_5, window_bounds = array<i64: 8, 128>}]} {
    %c0 = arith.constant 0 : index
    %c0_0 = arith.constant 0 : index
    %0 = vector.load %arg1[%c0, %c0_0] : memref<8x32xf32, #tpu.memory_space<vmem>>, vector<8x32xf32>
    %1 = arith.truncf %0 : vector<8x32xf32> to vector<8x32xbf16>
    %c0_1 = arith.constant 0 : index
    %c0_2 = arith.constant 0 : index
    %2 = vector.load %arg2[%c0_1, %c0_2] : memref<32x32xbf16, #tpu.memory_space<vmem>>, vector<32x32xbf16>
    %cst = arith.constant dense<0.000000e+00> : vector<8x32xf32>
    %3 = tpu.matmul %1, %2, %cst {dimension_numbers = #tpu.dot_dimension_numbers<[1], [0], [0], [1], [0, 0, 1, 1], [], []>} : vector<8x32xbf16>, vector<32x32xbf16>, vector<8x32xf32> -> vector<8x32xf32>
    %c0_3 = arith.constant 0 : index
    %c0_4 = arith.constant 0 : index
    %4 = vector.load %arg3[%c0_3, %c0_4] : memref<1x32xf32, #tpu.memory_space<vmem>>, vector<1x32xf32>
    %5 = vector.broadcast %4 : vector<1x32xf32> to vector<8x32xf32>
    %6 = arith.addf %3, %5 : vector<8x32xf32>
    %cst_5 = arith.constant 0.000000e+00 : f32
    %7 = vector.broadcast %cst_5 : f32 to vector<8x32xf32>
    %8 = arith.maximumf %6, %7 : vector<8x32xf32>
    %9 = arith.truncf %8 : vector<8x32xf32> to vector<8x32xbf16>
    %c0_6 = arith.constant 0 : index
    %c0_7 = arith.constant 0 : index
    %10 = vector.load %arg4[%c0_6, %c0_7] : memref<32x128xbf16, #tpu.memory_space<vmem>>, vector<32x128xbf16>
    %cst_8 = arith.constant dense<0.000000e+00> : vector<8x128xf32>
    %11 = tpu.matmul %9, %10, %cst_8 {dimension_numbers = #tpu.dot_dimension_numbers<[1], [0], [0], [1], [0, 0, 1, 1], [], []>} : vector<8x32xbf16>, vector<32x128xbf16>, vector<8x128xf32> -> vector<8x128xf32>
    %c0_9 = arith.constant 0 : index
    %c0_10 = arith.constant 0 : index
    %12 = vector.load %arg5[%c0_9, %c0_10] : memref<1x128xf32, #tpu.memory_space<vmem>>, vector<1x128xf32>
    %13 = vector.broadcast %12 : vector<1x128xf32> to vector<8x128xf32>
    %14 = arith.addf %11, %13 : vector<8x128xf32>
    %c0_11 = arith.constant 0 : index
    %c0_12 = arith.constant 0 : index
    %15 = vector.load %arg6[%c0_11, %c0_12] : memref<8x128xf32, #tpu.memory_space<vmem>>, vector<8x128xf32>
    tpu.vector_store %arg6[%c0_11, %c0_12], %14 {strides = array<i32>} : memref<8x128xf32, #tpu.memory_space<vmem>>, vector<8x128xf32>,
    return
  }
  func.func @transform_0(%arg0: i32) -> (i32, i32) {
    %c0_i32 = arith.constant 0 : i32
    %c0_i32_0 = arith.constant 0 : i32
    return %arg0, %c0_i32 : i32, i32
  }
  func.func @transform_1(%arg0: i32) -> (i32, i32) {
    %c0_i32 = arith.constant 0 : i32
    %c0_i32_0 = arith.constant 0 : i32
    %c0_i32_1 = arith.constant 0 : i32
    return %c0_i32, %c0_i32_0 : i32, i32
  }
  func.func @transform_2(%arg0: i32) -> (i32, i32) {
    %c0_i32 = arith.constant 0 : i32
    %c0_i32_0 = arith.constant 0 : i32
    %c0_i32_1 = arith.constant 0 : i32
    return %c0_i32, %c0_i32_0 : i32, i32
  }
  func.func @transform_3(%arg0: i32) -> (i32, i32) {
    %c0_i32 = arith.constant 0 : i32
    %c0_i32_0 = arith.constant 0 : i32
    %c0_i32_1 = arith.constant 0 : i32
    return %c0_i32, %c0_i32_0 : i32, i32
  }
  func.func @transform_4(%arg0: i32) -> (i32, i32) {
    %c0_i32 = arith.constant 0 : i32
    %c0_i32_0 = arith.constant 0 : i32
    %c0_i32_1 = arith.constant 0 : i32
    return %c0_i32, %c0_i32_0 : i32, i32
  }
  func.func @transform_5(%arg0: i32) -> (i32, i32) {
    %c0_i32 = arith.constant 0 : i32
    %c0_i32_0 = arith.constant 0 : i32
    return %arg0, %c0_i32 : i32, i32
  }
}

</mosaic_0001>

<llo_original>
// kernel: tpu_custom_call.1
$region0: #{tpu_custom_call.1}
  #allocation0 [shape = 'u32[]', space=smem, size = 0x4, offset = 0x4, fixed_abs, tag = 'smem constant byte address 0x4 - core index']
  #allocation1 [shape = 'u32[72,128]{1,0:T(1,128)}', space=vmem, size = 0x9000, scoped, tag = 'internal scratch']
  %s0 = inlined_call_operand.hbm [shape: f32[8,32], index: 0, kind: input, shape index: {}]
  %s1 = inlined_call_operand.hbm [shape: bf16[32,32], index: 1, kind: input, shape index: {}]
  %s2 = inlined_call_operand.vmem [shape: f32[1,32], index: 2, kind: input, shape index: {}]
  %s3 = inlined_call_operand.hbm [shape: bf16[32,128], index: 3, kind: input, shape index: {}]
  %s4 = inlined_call_operand.vmem [shape: f32[1,128], index: 4, kind: input, shape index: {}]
  %s5 = inlined_call_operand.hbm [shape: f32[8,128], index: 5, kind: output, shape index: {}]
  %s6 = sld [smem:[#allocation0]]
  $region42: #{tpu_custom_call.1} parent=0
    _
  %s8 = ssub.s32 1, %s6
  %s9 = scalar_select 0, %s8, %s6
  $region1: #{tpu_custom_call.1} parent=0
    #allocation2 [shape = 'u8[4096]{0}', space=vmem, size = 0x1000, scoped, tag = 'input window, operand 0, single buffered']
    #allocation3 [shape = 's32[1]{0}', space=sflag, size = 0x4, scoped, tag = 'scoped memory for tpu_custom_call.1']
    #allocation4 [shape = 's32[1]{0}', space=sflag, size = 0x4, scoped, tag = 'scoped memory for tpu_custom_call.1']
    #allocation5 [shape = 'u8[8192]{0}', space=vmem, size = 0x2000, scoped, tag = 'input window, operand 1, single buffered']
    #allocation6 [shape = 's32[1]{0}', space=sflag, size = 0x4, scoped, tag = 'scoped memory for tpu_custom_call.1']
    #allocation7 [shape = 'u8[8192]{0}', space=vmem, size = 0x2000, scoped, tag = 'input window, operand 3, single buffered']
    #allocation8 [shape = 'u8[4096]{0}', space=vmem, size = 0x1000, scoped, tag = 'output window, operand 0, single buffered']
    %10 = vsyncpa [#allocation3], 0
    %11 = vsyncpa [#allocation6], 0
    %12 = vsyncpa [#allocation4], 0
    // Predicated region
    $region2: #{tpu_custom_call.1} parent=1 // pred_check
      _
    $region3: #{tpu_custom_call.1} parent=1 // pred_check_branch
      %14 = sbr.rel (0) target = $region5
    $region4: #{tpu_custom_call.1} parent=1 // pred_region
      %16 = vsyncadd [#allocation3], 0
      %s18 = sshll.u32 %s0, 4
      %s19 = int_to_ptr.hbm [resolvable:$true] %s18
      %s20 = sshll.u32 [#allocation2], 4
      %s21 = int_to_ptr.vmem [resolvable:$true] %s20
      %23 = dma.hbm_to_vmem [thread:$0]  %s19, 128, %s21, [#allocation3]
    $region5: #{tpu_custom_call.1} parent=1 // pred_fallthru
      _
    // Predicated region
    $region6: #{tpu_custom_call.1} parent=1 // pred_check
      _
    $region7: #{tpu_custom_call.1} parent=1 // pred_check_branch
      %25 = sbr.rel (0) target = $region9
    $region8: #{tpu_custom_call.1} parent=1 // pred_region
      %27 = vsyncadd [#allocation6], 0
      %s28 = sshll.u32 %s1, 4
      %s29 = int_to_ptr.hbm [resolvable:$true] %s28
      %s30 = sshll.u32 [#allocation5], 4
      %s31 = int_to_ptr.vmem [resolvable:$true] %s30
      %36 = dma.hbm_to_vmem [thread:$0]  %s29, 256, %s31, [#allocation6], 64, 64, 4
    $region9: #{tpu_custom_call.1} parent=1 // pred_fallthru
      _
    // Predicated region
    $region10: #{tpu_custom_call.1} parent=1 // pred_check
      _
    $region11: #{tpu_custom_call.1} parent=1 // pred_check_branch
      %38 = sbr.rel (0) target = $region13
    $region12: #{tpu_custom_call.1} parent=1 // pred_region
      _
    $region13: #{tpu_custom_call.1} parent=1 // pred_fallthru
      _
    // Predicated region
    $region14: #{tpu_custom_call.1} parent=1 // pred_check
      _
    $region15: #{tpu_custom_call.1} parent=1 // pred_check_branch
      %40 = sbr.rel (0) target = $region17
    $region16: #{tpu_custom_call.1} parent=1 // pred_region
      %42 = vsyncadd [#allocation6], 0
      %s43 = sshll.u32 %s3, 4
      %s44 = int_to_ptr.hbm [resolvable:$true] %s43
      %s45 = sshll.u32 [#allocation7], 4
      %s46 = int_to_ptr.vmem [resolvable:$true] %s45
      %51 = dma.hbm_to_vmem [thread:$0]  %s44, 256, %s46, [#allocation6], 64, 64, 4
    $region17: #{tpu_custom_call.1} parent=1 // pred_fallthru
      _
    // Predicated region
    $region18: #{tpu_custom_call.1} parent=1 // pred_check
      _
    $region19: #{tpu_custom_call.1} parent=1 // pred_check_branch
      %53 = sbr.rel (0) target = $region21
    $region20: #{tpu_custom_call.1} parent=1 // pred_region
      _
    $region21: #{tpu_custom_call.1} parent=1 // pred_fallthru
      _
    // Predicated region
    $region22: #{tpu_custom_call.1} parent=1 // pred_check
      _
    $region23: #{tpu_custom_call.1} parent=1 // pred_check_branch
      %55 = sbr.rel (0) target = $region25
    $region24: #{tpu_custom_call.1} parent=1 // pred_region
      %57 = dma.done [#allocation3], 128
    $region25: #{tpu_custom_call.1} parent=1 // pred_fallthru
      _
    // Predicated region
    $region26: #{tpu_custom_call.1} parent=1 // pred_check
      _
    $region27: #{tpu_custom_call.1} parent=1 // pred_check_branch
      %59 = sbr.rel (0) target = $region29
    $region28: #{tpu_custom_call.1} parent=1 // pred_region
      %61 = dma.done [#allocation6], 256
    $region29: #{tpu_custom_call.1} parent=1 // pred_fallthru
      _
    // Predicated region
    $region30: #{tpu_custom_call.1} parent=1 // pred_check
      _
    $region31: #{tpu_custom_call.1} parent=1 // pred_check_branch
      %63 = sbr.rel (0) target = $region33
    $region32: #{tpu_custom_call.1} parent=1 // pred_region
      %65 = dma.done [#allocation6], 256
    $region33: #{tpu_custom_call.1} parent=1 // pred_fallthru
      _
    %v67 = vld [vmem:[#allocation2] sm:$0xff]
    %v68 = vpack.c.bf16 %v67, %v67
    %v69 = vld [vmem:[#allocation5] sm:$0xf]
    %v70 = vld [vmem:[#allocation5 + $0x4] sm:$0xf]
    %v71 = vld [vmem:[#allocation5 + $0x8] sm:$0xf]
    %v72 = vld [vmem:[#allocation5 + $0xc] sm:$0xf]
    %v73 = vld [vmem:[%s2] sm:$0x1]
    %v75 = vperm.slane %v73, 0
    %v81 = vunpack.c.l.b16 %v69
    %v82 = vunpack.c.l.b16 %v70
    %v83 = vunpack.c.l.b16 %v71
    %v84 = vunpack.c.l.b16 %v72
    %v85 = vpack.c.b16 %v82, %v81
    %v86 = vpack.c.b16 %v84, %v83
    %vm89 = vcmask 261120
    %v91 = vsel %vm89, %v68, 0
    %93 = vmatpush.bf16.msra.mxu0 0
    %94 = vmatpush.bf16.msra.mxu0 0
    %95 = vmatpush.bf16.msra.mxu0 0
    %96 = vmatpush.bf16.msra.mxu0 0
    %97 = vmatpush.bf16.msra.mxu0 0
    %98 = vmatpush.bf16.msra.mxu0 0
    %99 = vmatpush.bf16.msra.mxu0 %v86
    %100 = vmatpush.bf16.msra.mxu0 %v85
    %101 = vmatmul.bf16.gmra.mxu0 %v91
    %v102 = vpop.f32.mrf.mxu0
    %v103 = vadd.f32 %v75, %v102
    %v104 = vpop.f32.mrf.mxu0
    %105 = vdwg.mxu0
    %v106 = vmax.f32 %v103, 0.0
    %v107 = vpack.c.bf16 %v106, %v106
    %v108 = vld [vmem:[#allocation7] sm:$0xf]
    %v109 = vld [vmem:[#allocation7 + $0x4] sm:$0xf]
    %v110 = vld [vmem:[#allocation7 + $0x8] sm:$0xf]
    %v111 = vld [vmem:[#allocation7 + $0xc] sm:$0xf]
    %v112 = vld [vmem:[%s4] sm:$0x1]
    %v114 = vperm.slane %v112, 0
    %v120 = vunpack.c.l.b16 %v108
    %v121 = vunpack.c.l.b16 %v109
    %v122 = vunpack.c.l.b16 %v110
    %v123 = vunpack.c.l.b16 %v111
    %v124 = vpack.c.b16 %v121, %v120
    %v125 = vpack.c.b16 %v123, %v122
    %v129 = vsel %vm89, %v107, 0
    %131 = vmatpush.bf16.msra.mxu0 0
    %132 = vmatpush.bf16.msra.mxu0 0
    %133 = vmatpush.bf16.msra.mxu0 0
    %134 = vmatpush.bf16.msra.mxu0 0
    %135 = vmatpush.bf16.msra.mxu0 0
    %136 = vmatpush.bf16.msra.mxu0 0
    %137 = vmatpush.bf16.msra.mxu0 %v125
    %138 = vmatpush.bf16.msra.mxu0 %v124
    %139 = vmatmul.bf16.gmra.mxu0 %v129
    %v140 = vpop.f32.mrf.mxu0
    %v141 = vadd.f32 %v114, %v140
    %v142 = vpop.f32.mrf.mxu0
    %143 = vdwg.mxu0
    %144 = vst [vmem:[#allocation8] sm:$0xff] %v141
    // Predicated region
    $region34: #{tpu_custom_call.1} parent=1 // pred_check
      _
    $region35: #{tpu_custom_call.1} parent=1 // pred_check_branch
      %146 = sbr.rel (0) target = $region37
    $region36: #{tpu_custom_call.1} parent=1 // pred_region
      %148 = vsyncadd [#allocation4], 0
      %s150 = sshll.u32 [#allocation8], 4
      %s151 = int_to_ptr.vmem [resolvable:$true] %s150
      %s152 = sshll.u32 %s5, 4
      %s153 = int_to_ptr.hbm [resolvable:$true] %s152
      %155 = dma.vmem_to_hbm [thread:$0]  %s151, 128, %s153, [#allocation4]
    $region37: #{tpu_custom_call.1} parent=1 // pred_fallthru
      _
    // Predicated region
    $region38: #{tpu_custom_call.1} parent=1 // pred_check
      _
    $region39: #{tpu_custom_call.1} parent=1 // pred_check_branch
      %157 = sbr.rel (0) target = $region41
    $region40: #{tpu_custom_call.1} parent=1 // pred_region
      %159 = dma.done [#allocation4], 128
    $region41: #{tpu_custom_call.1} parent=1 // pred_fallthru
      _
    %160 = vsyncpa [#allocation3], 1
    %161 = vsyncpa [#allocation6], 1
    %162 = vsyncpa [#allocation4], 1

</llo_original>
